<compile_context>
chip_gen: v7x
topology: tpu7x:2x2x1
jax: 0.10.0
libtpu: 0.0.40
codegen_flags: <defaults>
</compile_context>

<pallas_src>
import functools

import jax
import jax.numpy as jnp
from jax.experimental import pallas as pl
from jax.experimental.pallas import tpu as pltpu


def _round_up(x, m):
    return ((x + m - 1) // m) * m


def _pick_tile_m(M, cap):
    """Largest multiple-of-8 tile <= cap that divides M (no padding); else
    minimal padding with tile = round_up(min(cap, M), 8)."""
    cap = max(8, (min(cap, _round_up(M, 8)) // 8) * 8)
    t = cap
    while t >= 8:
        if M % t == 0:
            return t, M
        t -= 8
    return cap, _round_up(M, cap)


def _pick_tile_n(N, cap):
    """Largest multiple-of-128 tile <= cap that divides N; else full N
    (block == full array dim, weight stays resident — fallback path)."""
    if N < 128 or N % 128 != 0:
        return N
    t = (min(cap, N) // 128) * 128
    while t >= 128:
        if N % t == 0:
            return t
        t -= 128
    return N


def _projector_kernel(x_ref, w_ref, b_ref, o_ref):
    # x_ref: (tm, K) caller dtype, w_ref: (K, tn) bf16, b_ref: (1, tn) f32,
    # o_ref: (tm, tn) out_dtype.
    xb = x_ref[...].astype(w_ref.dtype)          # VPU cast, hides under MXU
    acc = jnp.dot(xb, w_ref[...], preferred_element_type=jnp.float32)
    acc = acc + b_ref[...]                       # f32 bias add, broadcast over rows
    o_ref[...] = acc.astype(o_ref.dtype)


def prepare_projector_params(weight, bias, compute_dtype=jnp.bfloat16):
    """One-time parameter prep (load time, NOT per forward call).

    weight: nn.Linear layout (proj_dim, hidden_dim) -> (hidden_dim, proj_dim)
            in the MXU compute dtype (bf16 on v5e/v6e/v7x).
    bias:   (proj_dim,) -> (1, proj_dim) f32 (bias add stays f32 in-kernel).
    """
    w_t = jnp.asarray(weight).T.astype(compute_dtype)
    b2d = jnp.asarray(bias).reshape(1, -1).astype(jnp.float32)
    return w_t, b2d


@functools.partial(jax.jit, static_argnames=("block_m", "block_n", "out_dtype"))
def paligemma_mm_projector(img_features, w_t, b2d, *, block_m=256, block_n=512,
                           out_dtype=jnp.bfloat16):
    """img_features: (..., hidden_dim) any float dtype; w_t: (hidden_dim, proj_dim)
    pre-transposed bf16; b2d: (1, proj_dim) f32. Returns (..., proj_dim) out_dtype.
    Numerics: bf16 MXU operands with f32 accumulation + f32 bias add."""
    *lead, hidden_dim = img_features.shape
    proj_dim = w_t.shape[1]

    x2d = img_features.reshape(-1, hidden_dim)   # (M, K), kept in caller dtype
    M = x2d.shape[0]

    tm, M_pad = _pick_tile_m(M, block_m)
    tn = _pick_tile_n(proj_dim, block_n)
    if M_pad != M:                               # ragged M only; common shapes skip this
        x2d = jnp.pad(x2d, ((0, M_pad - M), (0, 0)))

    grid_m = M_pad // tm
    grid_n = proj_dim // tn

    itemsize = lambda a: a.size * jnp.dtype(a.dtype).itemsize
    cost = pl.CostEstimate(
        flops=2 * M_pad * hidden_dim * proj_dim,
        transcendentals=0,
        bytes_accessed=(itemsize(x2d)                       # X read once
                        + grid_m * itemsize(w_t)            # W streamed per m-tile
                        + itemsize(b2d)
                        + M_pad * proj_dim * jnp.dtype(out_dtype).itemsize),
    )

    out = pl.pallas_call(
        _projector_kernel,
        out_shape=jax.ShapeDtypeStruct((M_pad, proj_dim), out_dtype),
        grid_spec=pltpu.PrefetchScalarGridSpec(
            num_scalar_prefetch=0,
            grid=(grid_m, grid_n),               # n innermost: W streams, X resident
            in_specs=[
                # X tile: constant along n -> DMA'd once per m-tile, VMEM-resident.
                pl.BlockSpec((tm, hidden_dim), lambda i, j: (i, 0)),
                # Weight streams in N-tiles, double-buffered against MXU compute.
                pl.BlockSpec((hidden_dim, tn), lambda i, j: (0, j)),
                pl.BlockSpec((1, tn), lambda i, j: (0, j)),
            ],
            out_specs=pl.BlockSpec((tm, tn), lambda i, j: (i, j)),
        ),
        compiler_params=pltpu.CompilerParams(
            # No reduction axis (single dot over full K) -> fully parallel grid;
            # lets v7x megacore shard either axis across its two TensorCores.
            dimension_semantics=("parallel", "parallel"),
        ),
        cost_estimate=cost,
    )(x2d, w_t, b2d)

    if M_pad != M:
        out = out[:M]
    return out.reshape(*lead, proj_dim)


if __name__ == "__main__":
    # Small synthetic shapes implied by the module: vision hidden_dim=32,
    # projection_dim=64, batch=2, num_patches (seq)=8.
    batch, seq, hidden_dim, proj_dim = 2, 8, 32, 64

    key = jax.random.PRNGKey(0)
    k_x, k_w, k_b = jax.random.split(key, 3)

    img_features = jax.random.normal(k_x, (batch, seq, hidden_dim), dtype=jnp.float32)
    # Same layouts as torch.nn.Linear(hidden_dim, proj_dim).weight / .bias
    weight = jax.random.normal(k_w, (proj_dim, hidden_dim), dtype=jnp.float32) * 0.02
    bias = jax.random.normal(k_b, (proj_dim,), dtype=jnp.float32) * 0.01

    # One-time param prep (transpose + bf16 cast hoisted out of the hot path).
    w_t, b2d = prepare_projector_params(weight, bias, compute_dtype=jnp.bfloat16)

    out = paligemma_mm_projector(img_features, w_t, b2d)
    out = jax.block_until_ready(out)

    # Reference in plain f32 JAX (same semantics as torch.nn.Linear).
    ref = img_features @ weight.T + bias
    assert out.shape == (batch, seq, proj_dim)
    assert out.dtype == jnp.bfloat16
    # bf16 operands / output with f32 accumulation -> bf16-level tolerance.
    assert jnp.allclose(out.astype(jnp.float32), ref, atol=2e-2, rtol=2e-2), \
        "mismatch vs reference"

    print("KERNEL_OK")
</pallas_src>

<mosaic_0001>
module attributes {stable_mosaic.version = 11 : i64} {
  func.func @_projector_kernel(%arg0: i32, %arg1: i32, %arg2: memref<16x32xf32, #tpu.memory_space<vmem>>, %arg3: memref<32x64xbf16, #tpu.memory_space<vmem>>, %arg4: memref<1x64xf32, #tpu.memory_space<vmem>>, %arg5: memref<16x64xbf16, #tpu.memory_space<vmem>>) attributes {dimension_semantics = [#tpu.dimension_semantics<parallel>, #tpu.dimension_semantics<parallel>], iteration_bounds = array<i64: 1, 1>, scalar_prefetch = 0 : i64, scratch_operands = 0 : i64, tpu.core_type = #tpu.core_type<tc>, window_params = [{transform_indices = @transform_0, window_bounds = array<i64: 16, 32>}, {transform_indices = @transform_1, window_bounds = array<i64: 32, 64>}, {transform_indices = @transform_2, window_bounds = array<i64: 1, 64>}, {transform_indices = @transform_3, window_bounds = array<i64: 16, 64>}]} {
    %c0 = arith.constant 0 : index
    %c0_0 = arith.constant 0 : index
    %0 = vector.load %arg2[%c0, %c0_0] : memref<16x32xf32, #tpu.memory_space<vmem>>, vector<16x32xf32>
    %1 = arith.truncf %0 : vector<16x32xf32> to vector<16x32xbf16>
    %c0_1 = arith.constant 0 : index
    %c0_2 = arith.constant 0 : index
    %2 = vector.load %arg3[%c0_1, %c0_2] : memref<32x64xbf16, #tpu.memory_space<vmem>>, vector<32x64xbf16>
    %cst = arith.constant dense<0.000000e+00> : vector<16x64xf32>
    %3 = tpu.matmul %1, %2, %cst {dimension_numbers = #tpu.dot_dimension_numbers<[1], [0], [0], [1], [0, 0, 1, 1], [], []>} : vector<16x32xbf16>, vector<32x64xbf16>, vector<16x64xf32> -> vector<16x64xf32>
    %c0_3 = arith.constant 0 : index
    %c0_4 = arith.constant 0 : index
    %4 = vector.load %arg4[%c0_3, %c0_4] : memref<1x64xf32, #tpu.memory_space<vmem>>, vector<1x64xf32>
    %5 = vector.broadcast %4 : vector<1x64xf32> to vector<16x64xf32>
    %6 = arith.addf %3, %5 : vector<16x64xf32>
    %7 = arith.truncf %6 : vector<16x64xf32> to vector<16x64xbf16>
    %c0_5 = arith.constant 0 : index
    %c0_6 = arith.constant 0 : index
    %8 = vector.load %arg5[%c0_5, %c0_6] : memref<16x64xbf16, #tpu.memory_space<vmem>>, vector<16x64xbf16>
    tpu.vector_store %arg5[%c0_5, %c0_6], %7 {strides = array<i32>} : memref<16x64xbf16, #tpu.memory_space<vmem>>, vector<16x64xbf16>,
    return
  }
  func.func @transform_0(%arg0: i32, %arg1: i32) -> (i32, i32) {
    %c0_i32 = arith.constant 0 : i32
    %c0_i32_0 = arith.constant 0 : i32
    return %arg0, %c0_i32 : i32, i32
  }
  func.func @transform_1(%arg0: i32, %arg1: i32) -> (i32, i32) {
    %c0_i32 = arith.constant 0 : i32
    %c0_i32_0 = arith.constant 0 : i32
    return %c0_i32, %arg1 : i32, i32
  }
  func.func @transform_2(%arg0: i32, %arg1: i32) -> (i32, i32) {
    %c0_i32 = arith.constant 0 : i32
    %c0_i32_0 = arith.constant 0 : i32
    return %c0_i32, %arg1 : i32, i32
  }
  func.func @transform_3(%arg0: i32, %arg1: i32) -> (i32, i32) {
    %c0_i32 = arith.constant 0 : i32
    return %arg0, %arg1 : i32, i32
  }
}

</mosaic_0001>

<llo_original>
// kernel: paligemma_mm_projector.1
$region0: #{paligemma_mm_projector.1}
  #allocation0 [shape = 'u32[]', space=smem, size = 0x4, offset = 0x4, fixed_abs, tag = 'smem constant byte address 0x4 - core index']
  #allocation1 [shape = 'u32[144,128]{1,0:T(1,128)}', space=vmem, size = 0x12000, scoped, tag = 'internal scratch']
  %s0 = inlined_call_operand.hbm [shape: f32[16,32], index: 0, kind: input, shape index: {}]
  %s1 = inlined_call_operand.hbm [shape: bf16[32,64], index: 1, kind: input, shape index: {}]
  %s2 = inlined_call_operand.vmem [shape: f32[1,64], index: 2, kind: input, shape index: {}]
  %s3 = inlined_call_operand.hbm [shape: bf16[16,64], index: 3, kind: output, shape index: {}]
  %s4 = sld [smem:[#allocation0]]
  $region30: #{paligemma_mm_projector.1} parent=0
    _
  %s6 = ssub.s32 1, %s4
  %s7 = scalar_select 0, %s6, %s4
  $region1: #{paligemma_mm_projector.1} parent=0
    #allocation2 [shape = 'u8[8192]{0}', space=vmem, size = 0x2000, scoped, tag = 'input window, operand 0, single buffered']
    #allocation3 [shape = 's32[1]{0}', space=sflag, size = 0x4, scoped, tag = 'scoped memory for paligemma_mm_projector.1']
    #allocation4 [shape = 's32[1]{0}', space=sflag, size = 0x4, scoped, tag = 'scoped memory for paligemma_mm_projector.1']
    #allocation5 [shape = 'u8[8192]{0}', space=vmem, size = 0x2000, scoped, tag = 'input window, operand 1, single buffered']
    #allocation6 [shape = 's32[1]{0}', space=sflag, size = 0x4, scoped, tag = 'scoped memory for paligemma_mm_projector.1']
    #allocation7 [shape = 'u8[4096]{0}', space=vmem, size = 0x1000, scoped, tag = 'output window, operand 0, single buffered']
    %8 = vsyncpa [#allocation3], 0
    %9 = vsyncpa [#allocation6], 0
    %10 = vsyncpa [#allocation4], 0
    // Predicated region
    $region2: #{paligemma_mm_projector.1} parent=1 // pred_check
      _
    $region3: #{paligemma_mm_projector.1} parent=1 // pred_check_branch
      %12 = sbr.rel (0) target = $region5
    $region4: #{paligemma_mm_projector.1} parent=1 // pred_region
      %s14 = ssub.s32 256, 256
      %15 = vsyncadd [#allocation3], %s14
      %s16 = sshll.u32 [#allocation2], 4
      %s17 = int_to_ptr.vmem [resolvable:$true] %s16
      %22 = dma.hbm_to_vmem [thread:$0]  %s0, 256, %s17, [#allocation3], 128, 128, 8
    $region5: #{paligemma_mm_projector.1} parent=1 // pred_fallthru
      _
    // Predicated region
    $region6: #{paligemma_mm_projector.1} parent=1 // pred_check
      _
    $region7: #{paligemma_mm_projector.1} parent=1 // pred_check_branch
      %24 = sbr.rel (0) target = $region9
    $region8: #{paligemma_mm_projector.1} parent=1 // pred_region
      %s26 = ssub.s32 256, 256
      %27 = vsyncadd [#allocation6], %s26
      %s28 = sshll.u32 [#allocation5], 4
      %s29 = int_to_ptr.vmem [resolvable:$true] %s28
      %34 = dma.hbm_to_vmem [thread:$0]  %s1, 256, %s29, [#allocation6], 64, 64, 4
    $region9: #{paligemma_mm_projector.1} parent=1 // pred_fallthru
      _
    // Predicated region
    $region10: #{paligemma_mm_projector.1} parent=1 // pred_check
      _
    $region11: #{paligemma_mm_projector.1} parent=1 // pred_check_branch
      %36 = sbr.rel (0) target = $region13
    $region12: #{paligemma_mm_projector.1} parent=1 // pred_region
      _
    $region13: #{paligemma_mm_projector.1} parent=1 // pred_fallthru
      _
    // Predicated region
    $region14: #{paligemma_mm_projector.1} parent=1 // pred_check
      _
    $region15: #{paligemma_mm_projector.1} parent=1 // pred_check_branch
      %38 = sbr.rel (0) target = $region17
    $region16: #{paligemma_mm_projector.1} parent=1 // pred_region
      %39 = dma.done [#allocation3], 256
    $region17: #{paligemma_mm_projector.1} parent=1 // pred_fallthru
      _
    // Predicated region
    $region18: #{paligemma_mm_projector.1} parent=1 // pred_check
      _
    $region19: #{paligemma_mm_projector.1} parent=1 // pred_check_branch
      %41 = sbr.rel (0) target = $region21
    $region20: #{paligemma_mm_projector.1} parent=1 // pred_region
      %42 = dma.done [#allocation6], 256
    $region21: #{paligemma_mm_projector.1} parent=1 // pred_fallthru
      _
    %v44 = vld [vmem:[#allocation2] sm:$0xff]
    %v45 = vld [vmem:[#allocation2 + $0x8] sm:$0xff]
    %v46 = vpack.c.bf16 %v45, %v44
    %v47 = vld [vmem:[#allocation5] sm:$0xf]
    %v48 = vld [vmem:[#allocation5 + $0x4] sm:$0xf]
    %v49 = vld [vmem:[#allocation5 + $0x8] sm:$0xf]
    %v50 = vld [vmem:[#allocation5 + $0xc] sm:$0xf]
    %v51 = vld [vmem:[%s2] sm:$0x1]
    %v53 = vlaneseq
    %v54 = vshrl.u32 %v53, 7
    %v55 = vsub.s32 0, %v54
    %v56 = vrot.slane %v51, %v55
    %v62 = vunpack.c.l.b16 %v47
    %v63 = vunpack.c.l.b16 %v48
    %v64 = vunpack.c.l.b16 %v49
    %v65 = vunpack.c.l.b16 %v50
    %v66 = vpack.c.b16 %v63, %v62
    %v67 = vpack.c.b16 %v65, %v64
    %vm70 = vcmask 261120
    %v72 = vsel %vm70, %v46, 0
    %74 = vmatprep.subr.bf16.mxu0 0
    %75 = vmatpush1.bf16.msra.mxu0 %v66
    %76 = vmatprep.subr.bf16.mxu0 0
    %77 = vmatpush1.bf16.msra.mxu0 %v67
    %78 = vmatprep.subr.bf16.mxu0 0
    %79 = vmatpush1.bf16.msra.mxu0 0
    %80 = vmatprep.subr.bf16.mxu0 0
    %81 = vmatpush1.bf16.msra.mxu0 0
    %82 = vmatprep.subr.bf16.mxu0 0
    %83 = vmatpush1.bf16.msra.mxu0 0
    %84 = vmatprep.subr.bf16.mxu0 0
    %85 = vmatpush1.bf16.msra.mxu0 0
    %86 = vmatprep.subr.bf16.mxu0 0
    %87 = vmatpush1.bf16.msra.mxu0 0
    %88 = vmatprep.subr.bf16.mxu0 0
    %89 = vmatpush1.bf16.msra.mxu0 0
    %90 = vmatprep.subr.bf16.mxu0 0
    %91 = vmatpush1.bf16.msra.mxu0 0
    %92 = vmatprep.subr.bf16.mxu0 0
    %93 = vmatpush1.bf16.msra.mxu0 0
    %94 = vmatprep.subr.bf16.mxu0 0
    %95 = vmatpush1.bf16.msra.mxu0 0
    %96 = vmatprep.subr.bf16.mxu0 0
    %97 = vmatpush1.bf16.msra.mxu0 0
    %98 = vmatprep.subr.bf16.mxu0 0
    %99 = vmatpush1.bf16.msra.mxu0 0
    %100 = vmatprep.subr.bf16.mxu0 0
    %101 = vmatpush1.bf16.msra.mxu0 0
    %102 = vmatprep.subr.bf16.mxu0 0
    %103 = vmatpush1.bf16.msra.mxu0 0
    %104 = vmatprep.subr.bf16.mxu0 0
    %105 = vmatpush1.bf16.msra.mxu0 0
    %106 = vmatprep.mubr.bf16.mxu0 0
    %107 = vmatmul.mubr.bf16.gmra.mrb[0].mxu0 %v72
    %v108 = vpop.f32.mrb[0].mxu0
    %v109 = vadd.f32 %v56, %v108
    %v110 = vpop.f32.mrb[0].mxu0
    %v111 = vpop.f32.mrb[0].mxu0
    %v112 = vadd.f32 %v56, %v111
    %v113 = vpop.f32.mrb[0].mxu0
    %114 = vdwg.mxu0
    %v115 = vpack.c.bf16 %v112, %v109
    %v117 = vunpack.c.l.b16 %v115
    %v118 = vunpack.c.h.b16 %v115
    %v119 = vpack.c.b16 %v117, %v117
    %v120 = vpack.c.b16 %v118, %v118
    %vm123 = vcmask 519168
    %124 = vst.msk [vmem:[#allocation7] sm:$0xf] %vm123, %v119
    %125 = vst.msk [vmem:[#allocation7 + $0x4] sm:$0xf] %vm123, %v120
    // Predicated region
    $region22: #{paligemma_mm_projector.1} parent=1 // pred_check
      _
    $region23: #{paligemma_mm_projector.1} parent=1 // pred_check_branch
      %127 = sbr.rel (0) target = $region25
    $region24: #{paligemma_mm_projector.1} parent=1 // pred_region
      %s129 = ssub.s32 128, 128
      %130 = vsyncadd [#allocation4], %s129
      %s131 = sshll.u32 [#allocation7], 4
      %s132 = int_to_ptr.vmem [resolvable:$true] %s131
      %137 = dma.vmem_to_hbm [thread:$0]  %s132, 128, %s3, [#allocation4], 64, 64, 4
    $region25: #{paligemma_mm_projector.1} parent=1 // pred_fallthru
      _
    // Predicated region
    $region26: #{paligemma_mm_projector.1} parent=1 // pred_check
      _
    $region27: #{paligemma_mm_projector.1} parent=1 // pred_check_branch
      %139 = sbr.rel (0) target = $region29
    $region28: #{paligemma_mm_projector.1} parent=1 // pred_region
      %140 = dma.done [#allocation4], 128
    $region29: #{paligemma_mm_projector.1} parent=1 // pred_fallthru
      _
    %141 = vsyncpa [#allocation3], 1
    %142 = vsyncpa [#allocation6], 1
    %143 = vsyncpa [#allocation4], 1

</llo_original>
